<compile_context>
chip_gen: v6e
topology: v6e:2x2x1
jax: 0.10.0
libtpu: 0.0.40
codegen_flags: <defaults>
</compile_context>

<pallas_src>
import math

import jax
import jax.numpy as jnp
from jax.experimental import pallas as pl
from jax.experimental.pallas import tpu as pltpu

# ---------------- model hyperparameters (small, consistent with module) -----
B = 2          # batch
S = 8          # sequence length
D = 32         # d_model
H = 4          # heads
DK = D // H    # per-head dim
DFF = 64       # d_ff
EPS = 1e-6
NEG_INF = -1e9

BS = B * S     # 16 folded rows
HBS = H * BS   # 64 head-stacked rows

# ---- parameter-slab row layout (every section starts at lane 0) -------------
_R_WATTN = 0                      # rows   0:32   w_attn (32,128) = [wq|wk|wv|wo]
_R_BATTN = 32                     # row   32      b_attn (1,128)  = [bq|bk|bv|bo]
_R_B1 = 33                        # row   33      b1 (1,64)
_R_B2 = 34                        # row   34      b2 (1,32)
_R_G1, _R_BE1, _R_G2, _R_BE2 = 35, 36, 37, 38
_R_HSEL = 40                      # rows  40:104  head_sel (64,32)
_R_BIAS = _R_HSEL + HBS           # rows 104:168  fused attention bias (64,16)
_R_W1 = _R_BIAS + HBS             # rows 168:200  w1 (32,64)
_R_W2 = _R_W1 + D                 # rows 200:264  w2 (64,32)
_R_TOTAL = _R_W2 + DFF            # 264 rows


def _nr_reciprocal(a):
    # approx EUP reciprocal + one Newton-Raphson step: rel error ~1e-7.
    r = pl.reciprocal(a, approx=True)
    return r * (2.0 - a * r)


def _layer_norm(x, gamma, beta):
    # x: (rows, D); gamma/beta: (1, D).  Unbiased std (torch .std default).
    mean = jnp.mean(x, axis=-1, keepdims=True)
    var = jnp.sum((x - mean) ** 2, axis=-1, keepdims=True) / (x.shape[-1] - 1)
    inv = _nr_reciprocal(jnp.sqrt(var) + EPS)
    return gamma * ((x - mean) * inv) + beta


def encoder_layer_kernel(x_ref, p_ref, out_ref):
    x = x_ref[...]                                    # (B*S, D)

    # ---- static slices of the single parameter slab (no runtime cost) ------
    w_qkv = p_ref[_R_WATTN:_R_WATTN + D, 0:3 * D]     # (D, 3D)
    w_o = p_ref[_R_WATTN:_R_WATTN + D, 3 * D:4 * D]   # (D, D)
    b_qkv = p_ref[_R_BATTN:_R_BATTN + 1, 0:3 * D]
    b_o = p_ref[_R_BATTN:_R_BATTN + 1, 3 * D:4 * D]
    b1 = p_ref[_R_B1:_R_B1 + 1, 0:DFF]
    b2 = p_ref[_R_B2:_R_B2 + 1, 0:D]
    g1 = p_ref[_R_G1:_R_G1 + 1, 0:D]
    be1 = p_ref[_R_BE1:_R_BE1 + 1, 0:D]
    g2 = p_ref[_R_G2:_R_G2 + 1, 0:D]
    be2 = p_ref[_R_BE2:_R_BE2 + 1, 0:D]
    head_sel = p_ref[_R_HSEL:_R_HSEL + HBS, 0:D]      # (H*B*S, D) precomputed
    attn_bias = p_ref[_R_BIAS:_R_BIAS + HBS, 0:BS]    # (H*B*S, B*S) pad+batch mask
    w1 = p_ref[_R_W1:_R_W1 + D, 0:DFF]                # (D, DFF)
    w2 = p_ref[_R_W2:_R_W2 + DFF, 0:D]                # (DFF, D)

    # ---------------- sublayer 0: self-attention (pre-norm) ----------------
    ln1 = _layer_norm(x, g1, be1)

    # One fused QKV projection (single MXU push with N = 3*D).
    qkv = jnp.dot(ln1, w_qkv, preferred_element_type=jnp.float32) + b_qkv   # (B*S, 3D)
    q = qkv[:, 0:D] * (1.0 / math.sqrt(DK))           # scale applied once
    k = qkv[:, D:2 * D]
    v = qkv[:, 2 * D:3 * D]

    # Batch- and head-fused attention: rows of qm are ordered head-major
    # (h, b, i); head_sel zeroes q outside head h's columns, so one
    # (H*B*S, D) @ (D, B*S) matmul yields every head/batch score block at once.
    # attn_bias carries both key padding (-1e9) and cross-batch blocking (-1e9),
    # which underflow to exactly 0 after max-subtraction + exp.
    qm = jnp.concatenate([q] * H, axis=0) * head_sel                          # (64, 32)
    s = jnp.dot(qm, k.T, preferred_element_type=jnp.float32) + attn_bias      # (64, 16)
    s = s - jnp.max(s, axis=-1, keepdims=True)
    p = jnp.exp(s)
    p = p * _nr_reciprocal(jnp.sum(p, axis=-1, keepdims=True))

    o = jnp.dot(p, v, preferred_element_type=jnp.float32) * head_sel          # (64, 32)
    # head-major ordering -> head reduction is 3 whole-vreg adds -> (B*S, D).
    attn = o[0:BS, :] + o[BS:2 * BS, :] + o[2 * BS:3 * BS, :] + o[3 * BS:4 * BS, :]
    attn = jnp.dot(attn, w_o, preferred_element_type=jnp.float32) + b_o

    x1 = x + attn                                     # residual

    # ---------------- sublayer 1: feed-forward (pre-norm) ------------------
    ln2 = _layer_norm(x1, g2, be2)
    hdn = jnp.maximum(jnp.dot(ln2, w1, preferred_element_type=jnp.float32) + b1, 0.0)
    ffn = jnp.dot(hdn, w2, preferred_element_type=jnp.float32) + b2

    out_ref[...] = (x1 + ffn).astype(out_ref.dtype)


def _build_param_slab(params, padding_mask):
    """Pack all weights + precomputed constants into one lane-dense f32 slab."""
    (wq, bq, wk, bk, wv, bv, wo, bo, w1, b1, w2, b2, g1, be1, g2, be2) = params

    slab = jnp.zeros((_R_TOTAL, 128), jnp.float32)
    slab = slab.at[_R_WATTN:_R_WATTN + D, :].set(
        jnp.concatenate([wq, wk, wv, wo], axis=1))
    slab = slab.at[_R_BATTN, :].set(
        jnp.concatenate([bq, bk, bv, bo], axis=1).reshape(4 * D))
    slab = slab.at[_R_B1, :DFF].set(b1.reshape(DFF))
    slab = slab.at[_R_B2, :D].set(b2.reshape(D))
    slab = slab.at[_R_G1, :D].set(g1.reshape(D))
    slab = slab.at[_R_BE1, :D].set(be1.reshape(D))
    slab = slab.at[_R_G2, :D].set(g2.reshape(D))
    slab = slab.at[_R_BE2, :D].set(be2.reshape(D))

    # head selector: row block h (of B*S rows) keeps columns h*DK:(h+1)*DK.
    row_head = jnp.arange(HBS) // BS
    col_head = jnp.arange(D) // DK
    head_sel = (row_head[:, None] == col_head[None, :]).astype(jnp.float32)   # (64, 32)
    slab = slab.at[_R_HSEL:_R_HSEL + HBS, :D].set(head_sel)

    # fused additive bias: key padding (-1e9) merged with cross-batch block mask.
    pad_key = jnp.where(padding_mask.reshape(B, S) == 0, NEG_INF, 0.0)
    pad_key = pad_key.astype(jnp.float32).reshape(BS)                         # (16,)
    row_b = jnp.repeat(jnp.arange(B), S)                                      # (16,)
    same_batch = row_b[:, None] == row_b[None, :]                             # (16, 16)
    bias_bs = jnp.where(same_batch, pad_key[None, :], NEG_INF)
    attn_bias = jnp.tile(bias_bs, (H, 1)).astype(jnp.float32)                 # (64, 16)
    slab = slab.at[_R_BIAS:_R_BIAS + HBS, :BS].set(attn_bias)

    slab = slab.at[_R_W1:_R_W1 + D, :DFF].set(w1)
    slab = slab.at[_R_W2:_R_W2 + DFF, :D].set(w2)
    return slab


def encoder_layer(x, padding_mask, params):
    """x: (B, S, D) f32, padding_mask: (B, 1, S) int32 (1 = keep, 0 = pad)."""
    slab = _build_param_slab(params, padding_mask)    # (264, 128), one input DMA
    x2d = x.reshape(BS, D)

    out2d = pl.pallas_call(
        encoder_layer_kernel,
        out_shape=jax.ShapeDtypeStruct((BS, D), x.dtype),
        grid_spec=pltpu.PrefetchScalarGridSpec(
            num_scalar_prefetch=0,
            grid=(1,),
            in_specs=[pl.BlockSpec((BS, D), lambda i: (0, 0)),
                      pl.BlockSpec((_R_TOTAL, 128), lambda i: (0, 0))],
            out_specs=pl.BlockSpec((BS, D), lambda i: (0, 0)),
        ),
        compiler_params=pltpu.CompilerParams(
            dimension_semantics=("arbitrary",)),
    )(x2d, slab)
    return out2d.reshape(B, S, D)


# -------------------------- pure-JAX reference ------------------------------
def reference(x, padding_mask, params):
    (wq, bq, wk, bk, wv, bv, wo, bo, w1, b1, w2, b2, g1, be1, g2, be2) = params

    def ln(xx, g, b):
        m = jnp.mean(xx, axis=-1, keepdims=True)
        var = jnp.sum((xx - m) ** 2, axis=-1, keepdims=True) / (xx.shape[-1] - 1)
        return g * (xx - m) / (jnp.sqrt(var) + EPS) + b

    def single(xb, mb):                # xb: (S, D), mb: (1, S)
        l = ln(xb, g1, be1)
        q, k, v = l @ wq + bq, l @ wk + bk, l @ wv + bv
        outs = []
        for h in range(H):
            sl = slice(h * DK, (h + 1) * DK)
            s = (q[:, sl] @ k[:, sl].T) / math.sqrt(DK)
            s = jnp.where(mb == 0, -1e9, s)
            p = jax.nn.softmax(s, axis=-1)
            outs.append(p @ v[:, sl])
        a = jnp.concatenate(outs, axis=-1) @ wo + bo
        x1 = xb + a
        l2 = ln(x1, g2, be2)
        return x1 + (jnp.maximum(l2 @ w1 + b1, 0.0) @ w2 + b2)

    return jax.vmap(single)(x, padding_mask)


# ------------------------------- main ---------------------------------------
if __name__ == "__main__":
    key = jax.random.PRNGKey(0)
    keys = jax.random.split(key, 20)

    def init(k, shape, scale=0.05):
        return (scale * jax.random.normal(k, shape)).astype(jnp.float32)

    # Linear weights stored as [in, out] (y = x @ W + b, equivalent to nn.Linear).
    wq, wk, wv, wo = (init(keys[i], (D, D)) for i in range(4))
    bq, bk, bv, bo = (init(keys[4 + i], (1, D)) for i in range(4))
    w1 = init(keys[8], (D, DFF)); b1 = init(keys[9], (1, DFF))
    w2 = init(keys[10], (DFF, D)); b2 = init(keys[11], (1, D))
    g1 = jnp.ones((1, D), jnp.float32); be1 = jnp.zeros((1, D), jnp.float32)
    g2 = jnp.ones((1, D), jnp.float32); be2 = jnp.zeros((1, D), jnp.float32)
    params = (wq, bq, wk, bk, wv, bv, wo, bo, w1, b1, w2, b2, g1, be1, g2, be2)

    x = jax.random.normal(keys[12], (B, S, D), jnp.float32)
    # padding mask: batch 0 fully visible, batch 1 has last 2 positions padded.
    padding_mask = jnp.ones((B, 1, S), jnp.int32)
    padding_mask = padding_mask.at[1, 0, 6:].set(0)

    out = encoder_layer(x, padding_mask, params)
    out = jax.block_until_ready(out)

    ref = reference(x, padding_mask, params)
    assert out.shape == (B, S, D)
    assert jnp.allclose(out, ref, atol=1e-4, rtol=1e-4), "mismatch vs reference"

    print("KERNEL_OK")
</pallas_src>

<mosaic_0001>
module attributes {stable_mosaic.version = 11 : i64} {
  func.func @encoder_layer_kernel(%arg0: i32, %arg1: memref<16x32xf32, #tpu.memory_space<vmem>>, %arg2: memref<264x128xf32, #tpu.memory_space<vmem>>, %arg3: memref<16x32xf32, #tpu.memory_space<vmem>>) attributes {dimension_semantics = [#tpu.dimension_semantics<arbitrary>], iteration_bounds = array<i64: 1>, scalar_prefetch = 0 : i64, scratch_operands = 0 : i64, tpu.core_type = #tpu.core_type<tc>, window_params = [{pipeline_mode = #tpu.pipeline_mode<synchronous>, transform_indices = @transform_0, window_bounds = array<i64: 16, 32>}, {pipeline_mode = #tpu.pipeline_mode<synchronous>, transform_indices = @transform_1, window_bounds = array<i64: 264, 128>}, {pipeline_mode = #tpu.pipeline_mode<synchronous>, transform_indices = @transform_2, window_bounds = array<i64: 16, 32>}]} {
    %c0 = arith.constant 0 : index
    %c0_0 = arith.constant 0 : index
    %0 = vector.load %arg1[%c0, %c0_0] : memref<16x32xf32, #tpu.memory_space<vmem>>, vector<16x32xf32>
    %c0_1 = arith.constant 0 : index
    %c0_2 = arith.constant 0 : index
    %1 = vector.load %arg2[%c0_1, %c0_2] : memref<264x128xf32, #tpu.memory_space<vmem>>, vector<32x96xf32>
    %c0_3 = arith.constant 0 : index
    %c96 = arith.constant 96 : index
    %2 = vector.load %arg2[%c0_3, %c96] : memref<264x128xf32, #tpu.memory_space<vmem>>, vector<32x32xf32>
    %c32 = arith.constant 32 : index
    %c0_4 = arith.constant 0 : index
    %3 = vector.load %arg2[%c32, %c0_4] : memref<264x128xf32, #tpu.memory_space<vmem>>, vector<1x96xf32>
    %c32_5 = arith.constant 32 : index
    %c96_6 = arith.constant 96 : index
    %4 = vector.load %arg2[%c32_5, %c96_6] : memref<264x128xf32, #tpu.memory_space<vmem>>, vector<1x32xf32>
    %c33 = arith.constant 33 : index
    %c0_7 = arith.constant 0 : index
    %5 = vector.load %arg2[%c33, %c0_7] : memref<264x128xf32, #tpu.memory_space<vmem>>, vector<1x64xf32>
    %c34 = arith.constant 34 : index
    %c0_8 = arith.constant 0 : index
    %6 = vector.load %arg2[%c34, %c0_8] : memref<264x128xf32, #tpu.memory_space<vmem>>, vector<1x32xf32>
    %c35 = arith.constant 35 : index
    %c0_9 = arith.constant 0 : index
    %7 = vector.load %arg2[%c35, %c0_9] : memref<264x128xf32, #tpu.memory_space<vmem>>, vector<1x32xf32>
    %c36 = arith.constant 36 : index
    %c0_10 = arith.constant 0 : index
    %8 = vector.load %arg2[%c36, %c0_10] : memref<264x128xf32, #tpu.memory_space<vmem>>, vector<1x32xf32>
    %c37 = arith.constant 37 : index
    %c0_11 = arith.constant 0 : index
    %9 = vector.load %arg2[%c37, %c0_11] : memref<264x128xf32, #tpu.memory_space<vmem>>, vector<1x32xf32>
    %c38 = arith.constant 38 : index
    %c0_12 = arith.constant 0 : index
    %10 = vector.load %arg2[%c38, %c0_12] : memref<264x128xf32, #tpu.memory_space<vmem>>, vector<1x32xf32>
    %c40 = arith.constant 40 : index
    %c0_13 = arith.constant 0 : index
    %11 = vector.load %arg2[%c40, %c0_13] : memref<264x128xf32, #tpu.memory_space<vmem>>, vector<64x32xf32>
    %c104 = arith.constant 104 : index
    %c0_14 = arith.constant 0 : index
    %12 = vector.load %arg2[%c104, %c0_14] : memref<264x128xf32, #tpu.memory_space<vmem>>, vector<64x16xf32>
    %c168 = arith.constant 168 : index
    %c0_15 = arith.constant 0 : index
    %13 = vector.load %arg2[%c168, %c0_15] : memref<264x128xf32, #tpu.memory_space<vmem>>, vector<32x64xf32>
    %c200 = arith.constant 200 : index
    %c0_16 = arith.constant 0 : index
    %14 = vector.load %arg2[%c200, %c0_16] : memref<264x128xf32, #tpu.memory_space<vmem>>, vector<64x32xf32>
    %cst = arith.constant dense<0.000000e+00> : vector<16xf32>
    %15 = vector.multi_reduction <add>, %0, %cst [1] : vector<16x32xf32> to vector<16xf32>
    %16 = vector.shape_cast %15 : vector<16xf32> to vector<16x1xf32>
    %cst_17 = arith.constant 3.200000e+01 : f32
    %17 = vector.broadcast %cst_17 : f32 to vector<16x1xf32>
    %18 = arith.divf %16, %17 : vector<16x1xf32>
    %19 = vector.broadcast %18 : vector<16x1xf32> to vector<16x32xf32>
    %20 = arith.subf %0, %19 : vector<16x32xf32>
    %21 = arith.mulf %20, %20 : vector<16x32xf32>
    %cst_18 = arith.constant dense<0.000000e+00> : vector<16xf32>
    %22 = vector.multi_reduction <add>, %21, %cst_18 [1] : vector<16x32xf32> to vector<16xf32>
    %23 = vector.shape_cast %22 : vector<16xf32> to vector<16x1xf32>
    %cst_19 = arith.constant 3.100000e+01 : f32
    %24 = vector.broadcast %cst_19 : f32 to vector<16x1xf32>
    %25 = arith.divf %23, %24 : vector<16x1xf32>
    %26 = math.sqrt %25 : vector<16x1xf32>
    %cst_20 = arith.constant 9.99999997E-7 : f32
    %27 = vector.broadcast %cst_20 : f32 to vector<16x1xf32>
    %28 = arith.addf %26, %27 : vector<16x1xf32>
    %29 = tpu.reciprocal %28 {approx = true} : vector<16x1xf32> -> vector<16x1xf32>
    %30 = arith.mulf %28, %29 : vector<16x1xf32>
    %cst_21 = arith.constant 2.000000e+00 : f32
    %31 = vector.broadcast %cst_21 : f32 to vector<16x1xf32>
    %32 = arith.subf %31, %30 : vector<16x1xf32>
    %33 = arith.mulf %29, %32 : vector<16x1xf32>
    %34 = vector.broadcast %18 : vector<16x1xf32> to vector<16x32xf32>
    %35 = arith.subf %0, %34 : vector<16x32xf32>
    %36 = vector.broadcast %33 : vector<16x1xf32> to vector<16x32xf32>
    %37 = arith.mulf %35, %36 : vector<16x32xf32>
    %38 = vector.broadcast %7 : vector<1x32xf32> to vector<16x32xf32>
    %39 = arith.mulf %38, %37 : vector<16x32xf32>
    %40 = vector.broadcast %8 : vector<1x32xf32> to vector<16x32xf32>
    %41 = arith.addf %39, %40 : vector<16x32xf32>
    %cst_22 = arith.constant dense<0.000000e+00> : vector<16x96xf32>
    %42 = tpu.matmul %41, %1, %cst_22 {dimension_numbers = #tpu.dot_dimension_numbers<[1], [0], [0], [1], [0, 0, 1, 1], [], []>} : vector<16x32xf32>, vector<32x96xf32>, vector<16x96xf32> -> vector<16x96xf32>
    %43 = vector.broadcast %3 : vector<1x96xf32> to vector<16x96xf32>
    %44 = arith.addf %42, %43 : vector<16x96xf32>
    %45 = vector.extract_strided_slice %44 {offsets = [0, 0], sizes = [16, 32], strides = [1, 1]} : vector<16x96xf32> to vector<16x32xf32>
    %cst_23 = arith.constant 0.353553385 : f32
    %46 = vector.broadcast %cst_23 : f32 to vector<16x32xf32>
    %47 = arith.mulf %45, %46 : vector<16x32xf32>
    %48 = vector.extract_strided_slice %44 {offsets = [0, 32], sizes = [16, 32], strides = [1, 1]} : vector<16x96xf32> to vector<16x32xf32>
    %49 = vector.extract_strided_slice %44 {offsets = [0, 64], sizes = [16, 32], strides = [1, 1]} : vector<16x96xf32> to vector<16x32xf32>
    %50 = tpu.concatenate %47, %47, %47, %47 in 0 : vector<16x32xf32>, vector<16x32xf32>, vector<16x32xf32>, vector<16x32xf32> -> vector<64x32xf32>
    %51 = arith.mulf %50, %11 : vector<64x32xf32>
    %52 = tpu.transpose %48, [1, 0] : vector<16x32xf32> -> vector<32x16xf32>
    %cst_24 = arith.constant dense<0.000000e+00> : vector<64x16xf32>
    %53 = tpu.matmul %51, %52, %cst_24 {dimension_numbers = #tpu.dot_dimension_numbers<[1], [0], [0], [1], [0, 0, 1, 1], [], []>} : vector<64x32xf32>, vector<32x16xf32>, vector<64x16xf32> -> vector<64x16xf32>
    %54 = arith.addf %53, %12 : vector<64x16xf32>
    %cst_25 = arith.constant dense<0xFF800000> : vector<64xf32>
    %55 = vector.multi_reduction <maximumf>, %54, %cst_25 [1] : vector<64x16xf32> to vector<64xf32>
    %56 = vector.shape_cast %55 : vector<64xf32> to vector<64x1xf32>
    %57 = vector.broadcast %56 : vector<64x1xf32> to vector<64x16xf32>
    %58 = arith.subf %54, %57 : vector<64x16xf32>
    %59 = math.exp %58 : vector<64x16xf32>
    %cst_26 = arith.constant dense<0.000000e+00> : vector<64xf32>
    %60 = vector.multi_reduction <add>, %59, %cst_26 [1] : vector<64x16xf32> to vector<64xf32>
    %61 = vector.shape_cast %60 : vector<64xf32> to vector<64x1xf32>
    %62 = tpu.reciprocal %61 {approx = true} : vector<64x1xf32> -> vector<64x1xf32>
    %63 = arith.mulf %61, %62 : vector<64x1xf32>
    %cst_27 = arith.constant 2.000000e+00 : f32
    %64 = vector.broadcast %cst_27 : f32 to vector<64x1xf32>
    %65 = arith.subf %64, %63 : vector<64x1xf32>
    %66 = arith.mulf %62, %65 : vector<64x1xf32>
    %67 = vector.broadcast %66 : vector<64x1xf32> to vector<64x16xf32>
    %68 = arith.mulf %59, %67 : vector<64x16xf32>
    %cst_28 = arith.constant dense<0.000000e+00> : vector<64x32xf32>
    %69 = tpu.matmul %68, %49, %cst_28 {dimension_numbers = #tpu.dot_dimension_numbers<[1], [0], [0], [1], [0, 0, 1, 1], [], []>} : vector<64x16xf32>, vector<16x32xf32>, vector<64x32xf32> -> vector<64x32xf32>
    %70 = arith.mulf %69, %11 : vector<64x32xf32>
    %71 = vector.extract_strided_slice %70 {offsets = [0, 0], sizes = [16, 32], strides = [1, 1]} : vector<64x32xf32> to vector<16x32xf32>
    %72 = vector.extract_strided_slice %70 {offsets = [16, 0], sizes = [16, 32], strides = [1, 1]} : vector<64x32xf32> to vector<16x32xf32>
    %73 = arith.addf %71, %72 : vector<16x32xf32>
    %74 = vector.extract_strided_slice %70 {offsets = [32, 0], sizes = [16, 32], strides = [1, 1]} : vector<64x32xf32> to vector<16x32xf32>
    %75 = arith.addf %73, %74 : vector<16x32xf32>
    %76 = vector.extract_strided_slice %70 {offsets = [48, 0], sizes = [16, 32], strides = [1, 1]} : vector<64x32xf32> to vector<16x32xf32>
    %77 = arith.addf %75, %76 : vector<16x32xf32>
    %cst_29 = arith.constant dense<0.000000e+00> : vector<16x32xf32>
    %78 = tpu.matmul %77, %2, %cst_29 {dimension_numbers = #tpu.dot_dimension_numbers<[1], [0], [0], [1], [0, 0, 1, 1], [], []>} : vector<16x32xf32>, vector<32x32xf32>, vector<16x32xf32> -> vector<16x32xf32>
    %79 = vector.broadcast %4 : vector<1x32xf32> to vector<16x32xf32>
    %80 = arith.addf %78, %79 : vector<16x32xf32>
    %81 = arith.addf %0, %80 : vector<16x32xf32>
    %cst_30 = arith.constant dense<0.000000e+00> : vector<16xf32>
    %82 = vector.multi_reduction <add>, %81, %cst_30 [1] : vector<16x32xf32> to vector<16xf32>
    %83 = vector.shape_cast %82 : vector<16xf32> to vector<16x1xf32>
    %cst_31 = arith.constant 3.200000e+01 : f32
    %84 = vector.broadcast %cst_31 : f32 to vector<16x1xf32>
    %85 = arith.divf %83, %84 : vector<16x1xf32>
    %86 = vector.broadcast %85 : vector<16x1xf32> to vector<16x32xf32>
    %87 = arith.subf %81, %86 : vector<16x32xf32>
    %88 = arith.mulf %87, %87 : vector<16x32xf32>
    %cst_32 = arith.constant dense<0.000000e+00> : vector<16xf32>
    %89 = vector.multi_reduction <add>, %88, %cst_32 [1] : vector<16x32xf32> to vector<16xf32>
    %90 = vector.shape_cast %89 : vector<16xf32> to vector<16x1xf32>
    %cst_33 = arith.constant 3.100000e+01 : f32
    %91 = vector.broadcast %cst_33 : f32 to vector<16x1xf32>
    %92 = arith.divf %90, %91 : vector<16x1xf32>
    %93 = math.sqrt %92 : vector<16x1xf32>
    %cst_34 = arith.constant 9.99999997E-7 : f32
    %94 = vector.broadcast %cst_34 : f32 to vector<16x1xf32>
    %95 = arith.addf %93, %94 : vector<16x1xf32>
    %96 = tpu.reciprocal %95 {approx = true} : vector<16x1xf32> -> vector<16x1xf32>
    %97 = arith.mulf %95, %96 : vector<16x1xf32>
    %cst_35 = arith.constant 2.000000e+00 : f32
    %98 = vector.broadcast %cst_35 : f32 to vector<16x1xf32>
    %99 = arith.subf %98, %97 : vector<16x1xf32>
    %100 = arith.mulf %96, %99 : vector<16x1xf32>
    %101 = vector.broadcast %85 : vector<16x1xf32> to vector<16x32xf32>
    %102 = arith.subf %81, %101 : vector<16x32xf32>
    %103 = vector.broadcast %100 : vector<16x1xf32> to vector<16x32xf32>
    %104 = arith.mulf %102, %103 : vector<16x32xf32>
    %105 = vector.broadcast %9 : vector<1x32xf32> to vector<16x32xf32>
    %106 = arith.mulf %105, %104 : vector<16x32xf32>
    %107 = vector.broadcast %10 : vector<1x32xf32> to vector<16x32xf32>
    %108 = arith.addf %106, %107 : vector<16x32xf32>
    %cst_36 = arith.constant dense<0.000000e+00> : vector<16x64xf32>
    %109 = tpu.matmul %108, %13, %cst_36 {dimension_numbers = #tpu.dot_dimension_numbers<[1], [0], [0], [1], [0, 0, 1, 1], [], []>} : vector<16x32xf32>, vector<32x64xf32>, vector<16x64xf32> -> vector<16x64xf32>
    %110 = vector.broadcast %5 : vector<1x64xf32> to vector<16x64xf32>
    %111 = arith.addf %109, %110 : vector<16x64xf32>
    %cst_37 = arith.constant 0.000000e+00 : f32
    %112 = vector.broadcast %cst_37 : f32 to vector<16x64xf32>
    %113 = arith.maximumf %111, %112 : vector<16x64xf32>
    %cst_38 = arith.constant dense<0.000000e+00> : vector<16x32xf32>
    %114 = tpu.matmul %113, %14, %cst_38 {dimension_numbers = #tpu.dot_dimension_numbers<[1], [0], [0], [1], [0, 0, 1, 1], [], []>} : vector<16x64xf32>, vector<64x32xf32>, vector<16x32xf32> -> vector<16x32xf32>
    %115 = vector.broadcast %6 : vector<1x32xf32> to vector<16x32xf32>
    %116 = arith.addf %114, %115 : vector<16x32xf32>
    %117 = arith.addf %81, %116 : vector<16x32xf32>
    %c0_39 = arith.constant 0 : index
    %c0_40 = arith.constant 0 : index
    %118 = vector.load %arg3[%c0_39, %c0_40] : memref<16x32xf32, #tpu.memory_space<vmem>>, vector<16x32xf32>
    tpu.vector_store %arg3[%c0_39, %c0_40], %117 {strides = array<i32>} : memref<16x32xf32, #tpu.memory_space<vmem>>, vector<16x32xf32>,
    return
  }
  func.func @transform_0(%arg0: i32) -> (i32, i32) {
    %c0_i32 = arith.constant 0 : i32
    %c0_i32_0 = arith.constant 0 : i32
    %c0_i32_1 = arith.constant 0 : i32
    return %c0_i32, %c0_i32_0 : i32, i32
  }
  func.func @transform_1(%arg0: i32) -> (i32, i32) {
    %c0_i32 = arith.constant 0 : i32
    %c0_i32_0 = arith.constant 0 : i32
    %c0_i32_1 = arith.constant 0 : i32
    return %c0_i32, %c0_i32_0 : i32, i32
  }
  func.func @transform_2(%arg0: i32) -> (i32, i32) {
    %c0_i32 = arith.constant 0 : i32
    %c0_i32_0 = arith.constant 0 : i32
    %c0_i32_1 = arith.constant 0 : i32
    return %c0_i32, %c0_i32_0 : i32, i32
  }
}

</mosaic_0001>

<llo_original>
// kernel: tpu_custom_call.1
$region0: #{tpu_custom_call.1}
  #allocation0 [shape = 'u32[]', space=smem, size = 0x4, offset = 0x4, fixed_abs, tag = 'smem constant byte address 0x4 - core index']
  #allocation1 [shape = 'u32[144,128]{1,0:T(1,128)}', space=vmem, size = 0x12000, scoped, tag = 'internal scratch']
  %s0 = inlined_call_operand.hbm [shape: f32[16,32], index: 0, kind: input, shape index: {}]
  %s1 = inlined_call_operand.hbm [shape: f32[264,128], index: 1, kind: input, shape index: {}]
  %s2 = inlined_call_operand.hbm [shape: f32[16,32], index: 2, kind: output, shape index: {}]
  %s3 = sld [smem:[#allocation0]]
  $region26: #{tpu_custom_call.1} parent=0
    _
  %s5 = ssub.s32 1, %s3
  %s6 = scalar_select 0, %s5, %s3
  $region1: #{tpu_custom_call.1} parent=0
    #allocation2 [shape = 'u8[8192]{0}', space=vmem, size = 0x2000, scoped, tag = 'input window, operand 0, single buffered']
    #allocation3 [shape = 's32[1]{0}', space=sflag, size = 0x4, scoped, tag = 'scoped memory for tpu_custom_call.1']
    #allocation4 [shape = 's32[1]{0}', space=sflag, size = 0x4, scoped, tag = 'scoped memory for tpu_custom_call.1']
    #allocation5 [shape = 'u8[135168]{0}', space=vmem, size = 0x21000, scoped, tag = 'input window, operand 1, single buffered']
    #allocation6 [shape = 's32[1]{0}', space=sflag, size = 0x4, scoped, tag = 'scoped memory for tpu_custom_call.1']
    #allocation7 [shape = 'u8[8192]{0}', space=vmem, size = 0x2000, scoped, tag = 'output window, operand 0, single buffered']
    %7 = vsyncpa [#allocation3], 0
    %8 = vsyncpa [#allocation6], 0
    %9 = vsyncpa [#allocation4], 0
    // Predicated region
    $region2: #{tpu_custom_call.1} parent=1 // pred_check
      _
    $region3: #{tpu_custom_call.1} parent=1 // pred_check_branch
      %11 = sbr.rel (0) target = $region5
    $region4: #{tpu_custom_call.1} parent=1 // pred_region
      %s13 = ssub.s32 256, 256
      %14 = vsyncadd [#allocation3], %s13
      %s15 = sshll.u32 [#allocation2], 4
      %s16 = int_to_ptr.vmem [resolvable:$true] %s15
      %21 = dma.hbm_to_vmem [thread:$0]  %s0, 256, %s16, [#allocation3], 128, 128, 8
    $region5: #{tpu_custom_call.1} parent=1 // pred_fallthru
      _
    // Predicated region
    $region6: #{tpu_custom_call.1} parent=1 // pred_check
      _
    $region7: #{tpu_custom_call.1} parent=1 // pred_check_branch
      %23 = sbr.rel (0) target = $region9
    $region8: #{tpu_custom_call.1} parent=1 // pred_region
      %s25 = ssub.s32 4224, 4224
      %26 = vsyncadd [#allocation6], %s25
      %s27 = sshll.u32 [#allocation5], 4
      %s28 = int_to_ptr.vmem [resolvable:$true] %s27
      %33 = dma.hbm_to_vmem [thread:$0]  %s1, 4224, %s28, [#allocation6], 128, 128, 8
    $region9: #{tpu_custom_call.1} parent=1 // pred_fallthru
      _
    // Predicated region
    $region10: #{tpu_custom_call.1} parent=1 // pred_check
      _
    $region11: #{tpu_custom_call.1} parent=1 // pred_check_branch
      %35 = sbr.rel (0) target = $region13
    $region12: #{tpu_custom_call.1} parent=1 // pred_region
      %36 = dma.done [#allocation3], 256
    $region13: #{tpu_custom_call.1} parent=1 // pred_fallthru
      _
    // Predicated region
    $region14: #{tpu_custom_call.1} parent=1 // pred_check
      _
    $region15: #{tpu_custom_call.1} parent=1 // pred_check_branch
      %38 = sbr.rel (0) target = $region17
    $region16: #{tpu_custom_call.1} parent=1 // pred_region
      %39 = dma.done [#allocation6], 4224
    $region17: #{tpu_custom_call.1} parent=1 // pred_fallthru
      _
    %v40 = vld [vmem:[#allocation2] sm:$0xff]
    %v41 = vld [vmem:[#allocation2 + $0x8] sm:$0xff]
    %v42 = vld [vmem:[#allocation5] sm:$0xff]
    %v43 = vld [vmem:[#allocation5 + $0x8] sm:$0xff]
    %v44 = vld [vmem:[#allocation5 + $0x10] sm:$0xff]
    %v45 = vld [vmem:[#allocation5 + $0x18] sm:$0xff]
    %v46 = vld [vmem:[#allocation5 + $0x20] sm:$0x1]
    %v47 = vld [vmem:[#allocation5 + $0x21] sm:$0x1]
    %v48 = vld [vmem:[#allocation5 + $0x22] sm:$0x1]
    %v49 = vld [vmem:[#allocation5 + $0x23] sm:$0x1]
    %v50 = vld [vmem:[#allocation5 + $0x24] sm:$0x1]
    %v51 = vld [vmem:[#allocation5 + $0x25] sm:$0x1]
    %v52 = vld [vmem:[#allocation5 + $0x26] sm:$0x1]
    %v53 = vld [vmem:[#allocation5 + $0x28] sm:$0xff]
    %v54 = vld [vmem:[#allocation5 + $0x30] sm:$0xff]
    %v55 = vld [vmem:[#allocation5 + $0x38] sm:$0xff]
    %v56 = vld [vmem:[#allocation5 + $0x40] sm:$0xff]
    %v57 = vld [vmem:[#allocation5 + $0x48] sm:$0xff]
    %v58 = vld [vmem:[#allocation5 + $0x50] sm:$0xff]
    %v59 = vld [vmem:[#allocation5 + $0x58] sm:$0xff]
    %v60 = vld [vmem:[#allocation5 + $0x60] sm:$0xff]
    %v61 = vld [vmem:[#allocation5 + $0x68] sm:$0xff]
    %v62 = vld [vmem:[#allocation5 + $0x70] sm:$0xff]
    %v63 = vld [vmem:[#allocation5 + $0x78] sm:$0xff]
    %v64 = vld [vmem:[#allocation5 + $0x80] sm:$0xff]
    %v65 = vld [vmem:[#allocation5 + $0x88] sm:$0xff]
    %v66 = vld [vmem:[#allocation5 + $0x90] sm:$0xff]
    %v67 = vld [vmem:[#allocation5 + $0x98] sm:$0xff]
    %v68 = vld [vmem:[#allocation5 + $0xa0] sm:$0xff]
    %v69 = vld [vmem:[#allocation5 + $0xa8] sm:$0xff]
    %v70 = vld [vmem:[#allocation5 + $0xb0] sm:$0xff]
    %v71 = vld [vmem:[#allocation5 + $0xb8] sm:$0xff]
    %v72 = vld [vmem:[#allocation5 + $0xc0] sm:$0xff]
    %v73 = vld [vmem:[#allocation5 + $0xc8] sm:$0xff]
    %v74 = vld [vmem:[#allocation5 + $0xd0] sm:$0xff]
    %v75 = vld [vmem:[#allocation5 + $0xd8] sm:$0xff]
    %v76 = vld [vmem:[#allocation5 + $0xe0] sm:$0xff]
    %v77 = vld [vmem:[#allocation5 + $0xe8] sm:$0xff]
    %v78 = vld [vmem:[#allocation5 + $0xf0] sm:$0xff]
    %v79 = vld [vmem:[#allocation5 + $0xf8] sm:$0xff]
    %v80 = vld [vmem:[#allocation5 + $0x100] sm:$0xff]
    %vm81 = vcmask 261120
    %v82 = vsel %vm81, %v40, 0.0
    %83 = vadd.xlane.f32.xlu0 %v82
    %v84 = vpop.xlane.xlu0 %83
    %v85 = vsel %vm81, %v41, 0.0
    %86 = vadd.xlane.f32.xlu0 %v85
    %v87 = vpop.xlane.xlu0 %86
    %v88 = vrcp.pop 32.0
    %v89 = vmul.f32 %v84, %v88
    %v90 = vmul.f32 %v87, %v88
    %v91 = vsub.f32 %v40, %v89
    %v92 = vsub.f32 %v41, %v90
    %v93 = vmul.f32 %v91, %v91
    %v94 = vmul.f32 %v92, %v92
    %v95 = vsel %vm81, %v93, 0.0
    %96 = vadd.xlane.f32.xlu0 %v95
    %v97 = vpop.xlane.xlu0 %96
    %v98 = vsel %vm81, %v94, 0.0
    %99 = vadd.xlane.f32.xlu0 %v98
    %v100 = vpop.xlane.xlu0 %99
    %v101 = vrcp.pop 31.0
    %v102 = vmul.f32 %v97, %v101
    %v103 = vmul.f32 %v100, %v101
    %v104 = vrsqrt.pop %v102
    %v105 = vmul.f32 %v102, %v104
    %vm106 = vcmp.eq.f32.partialorder %v102, inf
    %v107 = vsel %vm106, %v102, %v105
    %vm108 = vcmp.eq.f32.partialorder %v102, 0.0
    %v109 = vand.u32 %v102, 2147483648
    %v110 = vsel %vm108, %v109, %v107
    %v111 = vrsqrt.pop %v103
    %v112 = vmul.f32 %v103, %v111
    %vm113 = vcmp.eq.f32.partialorder %v103, inf
    %v114 = vsel %vm113, %v103, %v112
    %vm115 = vcmp.eq.f32.partialorder %v103, 0.0
    %v116 = vand.u32 %v103, 2147483648
    %v117 = vsel %vm115, %v116, %v114
    %v118 = vadd.f32 %v110, 1e-06
    %v119 = vadd.f32 %v117, 1e-06
    %v120 = vrcp.pop %v118
    %v121 = vrcp.pop %v119
    %v122 = vmul.f32 %v118, %v120
    %v123 = vmul.f32 %v119, %v121
    %v124 = vsub.f32 2.0, %v122
    %v125 = vsub.f32 2.0, %v123
    %v126 = vmul.f32 %v120, %v124
    %v127 = vmul.f32 %v121, %v125
    %v128 = vmul.f32 %v91, %v126
    %v129 = vmul.f32 %v92, %v127
    %v130 = vlaneseq
    %v131 = vshrl.u32 %v130, 7
    %v132 = vsub.s32 0, %v131
    %v133 = vrot.slane %v49, %v132
    %v134 = vmul.f32 %v133, %v128
    %v135 = vmul.f32 %v133, %v129
    %v136 = vlaneseq
    %v137 = vshrl.u32 %v136, 7
    %v138 = vsub.s32 0, %v137
    %v139 = vrot.slane %v50, %v138
    %v140 = vadd.f32 %v134, %v139
    %v141 = vadd.f32 %v135, %v139
    %v142 = vlaneseq
    %v143 = vshrl.u32 %v142, 7
    %v144 = vsub.s32 0, %v143
    %v145 = vrot.slane %v46, %v144
    %v147 = vsel %vm81, %v140, 0
    %v150 = vsel %vm81, %v141, 0
    %152 = vmatprep.subr.mxu0 0.0
    %153 = vmatpush1.msra.mxu0 0.0
    %154 = vmatprep.subr.mxu0 0.0
    %155 = vmatpush1.msra.mxu0 0.0
    %156 = vmatprep.subr.mxu0 0.0
    %157 = vmatpush1.msra.mxu0 0.0
    %158 = vmatprep.subr.mxu0 0.0
    %159 = vmatpush1.msra.mxu0 0.0
    %160 = vmatprep.subr.mxu0 0.0
    %161 = vmatpush1.msra.mxu0 0.0
    %162 = vmatprep.subr.mxu0 0.0
    %163 = vmatpush1.msra.mxu0 0.0
    %164 = vmatprep.subr.mxu0 0.0
    %165 = vmatpush1.msra.mxu0 0.0
    %166 = vmatprep.subr.mxu0 0.0
    %167 = vmatpush1.msra.mxu0 0.0
    %168 = vmatprep.subr.mxu0 0.0
    %169 = vmatpush1.msra.mxu0 0.0
    %170 = vmatprep.subr.mxu0 0.0
    %171 = vmatpush1.msra.mxu0 0.0
    %172 = vmatprep.subr.mxu0 0.0
    %173 = vmatpush1.msra.mxu0 0.0
    %174 = vmatprep.subr.mxu0 0.0
    %175 = vmatpush1.msra.mxu0 0.0
    %176 = vmatprep.subr.mxu0 0.0
    %177 = vmatpush1.msra.mxu0 %v45
    %178 = vmatprep.subr.mxu0 0.0
    %179 = vmatpush1.msra.mxu0 %v44
    %180 = vmatprep.subr.mxu0 0.0
    %181 = vmatpush1.msra.mxu0 %v43
    %182 = vmatprep.subr.mxu0 0.0
    %183 = vmatpush1.msra.mxu0 %v42
    %184 = vmatprep.subr.mxu0 0.0
    %185 = vmatpush2.msra.mxu0 0.0
    %186 = vmatprep.subr.mxu0 0.0
    %187 = vmatpush2.msra.mxu0 0.0
    %188 = vmatprep.subr.mxu0 0.0
    %189 = vmatpush2.msra.mxu0 0.0
    %190 = vmatprep.subr.mxu0 0.0
    %191 = vmatpush2.msra.mxu0 0.0
    %192 = vmatprep.subr.mxu0 0.0
    %193 = vmatpush2.msra.mxu0 0.0
    %194 = vmatprep.subr.mxu0 0.0
    %195 = vmatpush2.msra.mxu0 0.0
    %196 = vmatprep.subr.mxu0 0.0
    %197 = vmatpush2.msra.mxu0 0.0
    %198 = vmatprep.subr.mxu0 0.0
    %199 = vmatpush2.msra.mxu0 0.0
    %200 = vmatprep.subr.mxu0 0.0
    %201 = vmatpush2.msra.mxu0 0.0
    %202 = vmatprep.subr.mxu0 0.0
    %203 = vmatpush2.msra.mxu0 0.0
    %204 = vmatprep.subr.mxu0 0.0
    %205 = vmatpush2.msra.mxu0 0.0
    %206 = vmatprep.subr.mxu0 0.0
    %207 = vmatpush2.msra.mxu0 0.0
    %208 = vmatprep.subr.mxu0 0.0
    %209 = vmatpush2.msra.mxu0 0.0
    %210 = vmatprep.subr.mxu0 0.0
    %211 = vmatpush2.msra.mxu0 0.0
    %212 = vmatprep.subr.mxu0 0.0
    %213 = vmatpush2.msra.mxu0 0.0
    %214 = vmatprep.subr.mxu0 0.0
    %215 = vmatpush2.msra.mxu0 0.0
    %216 = vmatprep.mubr.f32.mxu0 0.0
    %217 = vmatmul.mubr.f32.gmra.mxu0 %v147
    %v218 = vpop.f32.mrf.mxu0
    %v219 = vadd.f32 %v145, %v218
    %v220 = vpop.f32.mrf.mxu0
    %221 = vmatprep.mubr.f32.mxu0 0.0
    %222 = vmatmul.mubr.f32.gmra.mxu0 %v150
    %v223 = vpop.f32.mrf.mxu0
    %v224 = vadd.f32 %v145, %v223
    %v225 = vpop.f32.mrf.mxu0
    %226 = vdwg.mxu0
    %v227 = vmul.f32 %v219, 0.35355338
    %v228 = vmul.f32 %v224, 0.35355338
    %v229 = vmul.f32 %v227, %v53
    %v230 = vmul.f32 %v228, %v54
    %v231 = vmul.f32 %v227, %v55
    %v232 = vmul.f32 %v228, %v56
    %v233 = vmul.f32 %v227, %v57
    %v234 = vmul.f32 %v228, %v58
    %v235 = vmul.f32 %v227, %v59
    %v236 = vmul.f32 %v228, %v60
    %239 = vrot.lane.b32.xlu0 %v219, 96
    %v240 = vpop.permute.xlu0 %239
    %241 = vrot.lane.b32.xlu0 %v224, 96
    %v242 = vpop.permute.xlu0 %241
    %v244 = vsel %vm81, %v229, 0
    %v247 = vsel %vm81, %v230, 0
    %v250 = vsel %vm81, %v231, 0
    %v253 = vsel %vm81, %v232, 0
    %v256 = vsel %vm81, %v233, 0
    %v259 = vsel %vm81, %v234, 0
    %v262 = vsel %vm81, %v235, 0
    %v265 = vsel %vm81, %v236, 0
    %v267 = vsel %vm81, %v240, 0
    %v269 = vsel %vm81, %v242, 0
    %271 = vmatprep.subr.mxu0 0.0
    %272 = vmatpush1.xpose.msra.mxu0 0.0
    %273 = vmatprep.subr.mxu0 0.0
    %274 = vmatpush1.xpose.msra.mxu0 0.0
    %275 = vmatprep.subr.mxu0 0.0
    %276 = vmatpush1.xpose.msra.mxu0 0.0
    %277 = vmatprep.subr.mxu0 0.0
    %278 = vmatpush1.xpose.msra.mxu0 0.0
    %279 = vmatprep.subr.mxu0 0.0
    %280 = vmatpush1.xpose.msra.mxu0 0.0
    %281 = vmatprep.subr.mxu0 0.0
    %282 = vmatpush1.xpose.msra.mxu0 0.0
    %283 = vmatprep.subr.mxu0 0.0
    %284 = vmatpush1.xpose.msra.mxu0 0.0
    %285 = vmatprep.subr.mxu0 0.0
    %286 = vmatpush1.xpose.msra.mxu0 0.0
    %287 = vmatprep.subr.mxu0 0.0
    %288 = vmatpush1.xpose.msra.mxu0 0.0
    %289 = vmatprep.subr.mxu0 0.0
    %290 = vmatpush1.xpose.msra.mxu0 0.0
    %291 = vmatprep.subr.mxu0 0.0
    %292 = vmatpush1.xpose.msra.mxu0 0.0
    %293 = vmatprep.subr.mxu0 0.0
    %294 = vmatpush1.xpose.msra.mxu0 0.0
    %295 = vmatprep.subr.mxu0 0.0
    %296 = vmatpush1.xpose.msra.mxu0 0.0
    %297 = vmatprep.subr.mxu0 0.0
    %298 = vmatpush1.xpose.msra.mxu0 0.0
    %299 = vmatprep.subr.mxu0 0.0
    %300 = vmatpush1.xpose.msra.mxu0 %v269
    %301 = vmatprep.subr.mxu0 0.0
    %302 = vmatpush1.xpose.msra.mxu0 %v267
    %303 = vmatprep.subr.mxu0 0.0
    %304 = vmatpush2.xpose.msra.mxu0 0.0
    %305 = vmatprep.subr.mxu0 0.0
    %306 = vmatpush2.xpose.msra.mxu0 0.0
    %307 = vmatprep.subr.mxu0 0.0
    %308 = vmatpush2.xpose.msra.mxu0 0.0
    %309 = vmatprep.subr.mxu0 0.0
    %310 = vmatpush2.xpose.msra.mxu0 0.0
    %311 = vmatprep.subr.mxu0 0.0
    %312 = vmatpush2.xpose.msra.mxu0 0.0
    %313 = vmatprep.subr.mxu0 0.0
    %314 = vmatpush2.xpose.msra.mxu0 0.0
    %315 = vmatprep.subr.mxu0 0.0
    %316 = vmatpush2.xpose.msra.mxu0 0.0
    %317 = vmatprep.subr.mxu0 0.0
    %318 = vmatpush2.xpose.msra.mxu0 0.0
    %319 = vmatprep.subr.mxu0 0.0
    %320 = vmatpush2.xpose.msra.mxu0 0.0
    %321 = vmatprep.subr.mxu0 0.0
    %322 = vmatpush2.xpose.msra.mxu0 0.0
    %323 = vmatprep.subr.mxu0 0.0
    %324 = vmatpush2.xpose.msra.mxu0 0.0
    %325 = vmatprep.subr.mxu0 0.0
    %326 = vmatpush2.xpose.msra.mxu0 0.0
    %327 = vmatprep.subr.mxu0 0.0
    %328 = vmatpush2.xpose.msra.mxu0 0.0
    %329 = vmatprep.subr.mxu0 0.0
    %330 = vmatpush2.xpose.msra.mxu0 0.0
    %331 = vmatprep.subr.mxu0 0.0
    %332 = vmatpush2.xpose.msra.mxu0 0.0
    %333 = vmatprep.subr.mxu0 0.0
    %334 = vmatpush2.xpose.msra.mxu0 0.0
    %335 = vmatprep.mubr.f32.mxu0 0.0
    %336 = vmatmul.mubr.f32.gmra.mxu0 %v244
    %v337 = vpop.f32.mrf.mxu0
    %v338 = vadd.f32 %v61, %v337
    %v339 = vpop.f32.mrf.mxu0
    %340 = vmatprep.mubr.f32.mxu0 0.0
    %341 = vmatmul.mubr.f32.gmra.mxu0 %v247
    %v342 = vpop.f32.mrf.mxu0
    %v343 = vadd.f32 %v62, %v342
    %v344 = vpop.f32.mrf.mxu0
    %345 = vmatprep.mubr.f32.mxu0 0.0
    %346 = vmatmul.mubr.f32.gmra.mxu0 %v250
    %v347 = vpop.f32.mrf.mxu0
    %v348 = vadd.f32 %v63, %v347
    %v349 = vpop.f32.mrf.mxu0
    %350 = vmatprep.mubr.f32.mxu0 0.0
    %351 = vmatmul.mubr.f32.gmra.mxu0 %v253
    %v352 = vpop.f32.mrf.mxu0
    %v353 = vadd.f32 %v64, %v352
    %v354 = vpop.f32.mrf.mxu0
    %355 = vmatprep.mubr.f32.mxu0 0.0
    %356 = vmatmul.mubr.f32.gmra.mxu0 %v256
    %v357 = vpop.f32.mrf.mxu0
    %v358 = vadd.f32 %v65, %v357
    %v359 = vpop.f32.mrf.mxu0
    %360 = vmatprep.mubr.f32.mxu0 0.0
    %361 = vmatmul.mubr.f32.gmra.mxu0 %v259
    %v362 = vpop.f32.mrf.mxu0
    %v363 = vadd.f32 %v66, %v362
    %v364 = vpop.f32.mrf.mxu0
    %365 = vmatprep.mubr.f32.mxu0 0.0
    %366 = vmatmul.mubr.f32.gmra.mxu0 %v262
    %v367 = vpop.f32.mrf.mxu0
    %v368 = vadd.f32 %v67, %v367
    %v369 = vpop.f32.mrf.mxu0
    %370 = vmatprep.mubr.f32.mxu0 0.0
    %371 = vmatmul.mubr.f32.gmra.mxu0 %v265
    %v372 = vpop.f32.mrf.mxu0
    %v373 = vadd.f32 %v68, %v372
    %v374 = vpop.f32.mrf.mxu0
    %375 = vdwg.mxu0
    %vm376 = vcmask 130048
    %v377 = vsel %vm376, %v338, -inf
    %378 = vmax.xlane.f32.xlu0 %v377
    %v379 = vpop.xlane.xlu0 %378
    %v380 = vsel %vm376, %v343, -inf
    %381 = vmax.xlane.f32.xlu0 %v380
    %v382 = vpop.xlane.xlu0 %381
    %v383 = vsel %vm376, %v348, -inf
    %384 = vmax.xlane.f32.xlu0 %v383
    %v385 = vpop.xlane.xlu0 %384
    %v386 = vsel %vm376, %v353, -inf
    %387 = vmax.xlane.f32.xlu0 %v386
    %v388 = vpop.xlane.xlu0 %387
    %v389 = vsel %vm376, %v358, -inf
    %390 = vmax.xlane.f32.xlu0 %v389
    %v391 = vpop.xlane.xlu0 %390
    %v392 = vsel %vm376, %v363, -inf
    %393 = vmax.xlane.f32.xlu0 %v392
    %v394 = vpop.xlane.xlu0 %393
    %v395 = vsel %vm376, %v368, -inf
    %396 = vmax.xlane.f32.xlu0 %v395
    %v397 = vpop.xlane.xlu0 %396
    %v398 = vsel %vm376, %v373, -inf
    %399 = vmax.xlane.f32.xlu0 %v398
    %v400 = vpop.xlane.xlu0 %399
    %v401 = vsub.f32 %v338, %v379
    %v402 = vsub.f32 %v343, %v382
    %v403 = vsub.f32 %v348, %v385
    %v404 = vsub.f32 %v353, %v388
    %v405 = vsub.f32 %v358, %v391
    %v406 = vsub.f32 %v363, %v394
    %v407 = vsub.f32 %v368, %v397
    %v408 = vsub.f32 %v373, %v400
    %v409 = vmul.f32 %v401, 1.442695
    %v410 = vpow.pop %v409
    %v411 = vmul.f32 %v402, 1.442695
    %v412 = vpow.pop %v411
    %v413 = vmul.f32 %v403, 1.442695
    %v414 = vpow.pop %v413
    %v415 = vmul.f32 %v404, 1.442695
    %v416 = vpow.pop %v415
    %v417 = vmul.f32 %v405, 1.442695
    %v418 = vpow.pop %v417
    %v419 = vmul.f32 %v406, 1.442695
    %v420 = vpow.pop %v419
    %v421 = vmul.f32 %v407, 1.442695
    %v422 = vpow.pop %v421
    %v423 = vmul.f32 %v408, 1.442695
    %v424 = vpow.pop %v423
    %v425 = vsel %vm376, %v410, 0.0
    %426 = vadd.xlane.f32.xlu0 %v425
    %v427 = vpop.xlane.xlu0 %426
    %v428 = vsel %vm376, %v412, 0.0
    %429 = vadd.xlane.f32.xlu0 %v428
    %v430 = vpop.xlane.xlu0 %429
    %v431 = vsel %vm376, %v414, 0.0
    %432 = vadd.xlane.f32.xlu0 %v431
    %v433 = vpop.xlane.xlu0 %432
    %v434 = vsel %vm376, %v416, 0.0
    %435 = vadd.xlane.f32.xlu0 %v434
    %v436 = vpop.xlane.xlu0 %435
    %v437 = vsel %vm376, %v418, 0.0
    %438 = vadd.xlane.f32.xlu0 %v437
    %v439 = vpop.xlane.xlu0 %438
    %v440 = vsel %vm376, %v420, 0.0
    %441 = vadd.xlane.f32.xlu0 %v440
    %v442 = vpop.xlane.xlu0 %441
    %v443 = vsel %vm376, %v422, 0.0
    %444 = vadd.xlane.f32.xlu0 %v443
    %v445 = vpop.xlane.xlu0 %444
    %v446 = vsel %vm376, %v424, 0.0
    %447 = vadd.xlane.f32.xlu0 %v446
    %v448 = vpop.xlane.xlu0 %447
    %v449 = vrcp.pop %v427
    %v450 = vrcp.pop %v430
    %v451 = vrcp.pop %v433
    %v452 = vrcp.pop %v436
    %v453 = vrcp.pop %v439
    %v454 = vrcp.pop %v442
    %v455 = vrcp.pop %v445
    %v456 = vrcp.pop %v448
    %v457 = vmul.f32 %v427, %v449
    %v458 = vmul.f32 %v430, %v450
    %v459 = vmul.f32 %v433, %v451
    %v460 = vmul.f32 %v436, %v452
    %v461 = vmul.f32 %v439, %v453
    %v462 = vmul.f32 %v442, %v454
    %v463 = vmul.f32 %v445, %v455
    %v464 = vmul.f32 %v448, %v456
    %v465 = vsub.f32 2.0, %v457
    %v466 = vsub.f32 2.0, %v458
    %v467 = vsub.f32 2.0, %v459
    %v468 = vsub.f32 2.0, %v460
    %v469 = vsub.f32 2.0, %v461
    %v470 = vsub.f32 2.0, %v462
    %v471 = vsub.f32 2.0, %v463
    %v472 = vsub.f32 2.0, %v464
    %v473 = vmul.f32 %v449, %v465
    %v474 = vmul.f32 %v450, %v466
    %v475 = vmul.f32 %v451, %v467
    %v476 = vmul.f32 %v452, %v468
    %v477 = vmul.f32 %v453, %v469
    %v478 = vmul.f32 %v454, %v470
    %v479 = vmul.f32 %v455, %v471
    %v480 = vmul.f32 %v456, %v472
    %v481 = vmul.f32 %v410, %v473
    %v482 = vmul.f32 %v412, %v474
    %v483 = vmul.f32 %v414, %v475
    %v484 = vmul.f32 %v416, %v476
    %v485 = vmul.f32 %v418, %v477
    %v486 = vmul.f32 %v420, %v478
    %v487 = vmul.f32 %v422, %v479
    %v488 = vmul.f32 %v424, %v480
    %489 = vrot.lane.b32.xlu0 %v219, 64
    %v490 = vpop.permute.xlu0 %489
    %491 = vrot.lane.b32.xlu0 %v224, 64
    %v492 = vpop.permute.xlu0 %491
    %v496 = vsel %vm376, %v481, 0
    %v499 = vsel %vm376, %v482, 0
    %v502 = vsel %vm376, %v483, 0
    %v505 = vsel %vm376, %v484, 0
    %v508 = vsel %vm376, %v485, 0
    %v511 = vsel %vm376, %v486, 0
    %v514 = vsel %vm376, %v487, 0
    %v517 = vsel %vm376, %v488, 0
    %519 = vmatprep.subr.mxu0 0.0
    %520 = vmatpush1.msra.mxu0 0.0
    %521 = vmatprep.subr.mxu0 0.0
    %522 = vmatpush1.msra.mxu0 0.0
    %523 = vmatprep.subr.mxu0 0.0
    %524 = vmatpush1.msra.mxu0 0.0
    %525 = vmatprep.subr.mxu0 0.0
    %526 = vmatpush1.msra.mxu0 0.0
    %527 = vmatprep.subr.mxu0 0.0
    %528 = vmatpush1.msra.mxu0 0.0
    %529 = vmatprep.subr.mxu0 0.0
    %530 = vmatpush1.msra.mxu0 0.0
    %531 = vmatprep.subr.mxu0 0.0
    %532 = vmatpush1.msra.mxu0 0.0
    %533 = vmatprep.subr.mxu0 0.0
    %534 = vmatpush1.msra.mxu0 0.0
    %535 = vmatprep.subr.mxu0 0.0
    %536 = vmatpush1.msra.mxu0 0.0
    %537 = vmatprep.subr.mxu0 0.0
    %538 = vmatpush1.msra.mxu0 0.0
    %539 = vmatprep.subr.mxu0 0.0
    %540 = vmatpush1.msra.mxu0 0.0
    %541 = vmatprep.subr.mxu0 0.0
    %542 = vmatpush1.msra.mxu0 0.0
    %543 = vmatprep.subr.mxu0 0.0
    %544 = vmatpush1.msra.mxu0 0.0
    %545 = vmatprep.subr.mxu0 0.0
    %546 = vmatpush1.msra.mxu0 0.0
    %547 = vmatprep.subr.mxu0 0.0
    %548 = vmatpush1.msra.mxu0 %v492
    %549 = vmatprep.subr.mxu0 0.0
    %550 = vmatpush1.msra.mxu0 %v490
    %551 = vmatprep.subr.mxu0 0.0
    %552 = vmatpush2.msra.mxu0 0.0
    %553 = vmatprep.subr.mxu0 0.0
    %554 = vmatpush2.msra.mxu0 0.0
    %555 = vmatprep.subr.mxu0 0.0
    %556 = vmatpush2.msra.mxu0 0.0
    %557 = vmatprep.subr.mxu0 0.0
    %558 = vmatpush2.msra.mxu0 0.0
    %559 = vmatprep.subr.mxu0 0.0
    %560 = vmatpush2.msra.mxu0 0.0
    %561 = vmatprep.subr.mxu0 0.0
    %562 = vmatpush2.msra.mxu0 0.0
    %563 = vmatprep.subr.mxu0 0.0
    %564 = vmatpush2.msra.mxu0 0.0
    %565 = vmatprep.subr.mxu0 0.0
    %566 = vmatpush2.msra.mxu0 0.0
    %567 = vmatprep.subr.mxu0 0.0
    %568 = vmatpush2.msra.mxu0 0.0
    %569 = vmatprep.subr.mxu0 0.0
    %570 = vmatpush2.msra.mxu0 0.0
    %571 = vmatprep.subr.mxu0 0.0
    %572 = vmatpush2.msra.mxu0 0.0
    %573 = vmatprep.subr.mxu0 0.0
    %574 = vmatpush2.msra.mxu0 0.0
    %575 = vmatprep.subr.mxu0 0.0
    %576 = vmatpush2.msra.mxu0 0.0
    %577 = vmatprep.subr.mxu0 0.0
    %578 = vmatpush2.msra.mxu0 0.0
    %579 = vmatprep.subr.mxu0 0.0
    %580 = vmatpush2.msra.mxu0 0.0
    %581 = vmatprep.subr.mxu0 0.0
    %582 = vmatpush2.msra.mxu0 0.0
    %583 = vmatprep.mubr.f32.mxu0 0.0
    %584 = vmatmul.mubr.f32.gmra.mxu0 %v496
    %v585 = vpop.f32.mrf.mxu0
    %v586 = vadd.f32 0.0, %v585
    %v587 = vpop.f32.mrf.mxu0
    %588 = vmatprep.mubr.f32.mxu0 0.0
    %589 = vmatmul.mubr.f32.gmra.mxu0 %v499
    %v590 = vpop.f32.mrf.mxu0
    %v591 = vadd.f32 0.0, %v590
    %v592 = vpop.f32.mrf.mxu0
    %593 = vmatprep.mubr.f32.mxu0 0.0
    %594 = vmatmul.mubr.f32.gmra.mxu0 %v502
    %v595 = vpop.f32.mrf.mxu0
    %v596 = vadd.f32 0.0, %v595
    %v597 = vpop.f32.mrf.mxu0
    %598 = vmatprep.mubr.f32.mxu0 0.0
    %599 = vmatmul.mubr.f32.gmra.mxu0 %v505
    %v600 = vpop.f32.mrf.mxu0
    %v601 = vadd.f32 0.0, %v600
    %v602 = vpop.f32.mrf.mxu0
    %603 = vmatprep.mubr.f32.mxu0 0.0
    %604 = vmatmul.mubr.f32.gmra.mxu0 %v508
    %v605 = vpop.f32.mrf.mxu0
    %v606 = vadd.f32 0.0, %v605
    %v607 = vpop.f32.mrf.mxu0
    %608 = vmatprep.mubr.f32.mxu0 0.0
    %609 = vmatmul.mubr.f32.gmra.mxu0 %v511
    %v610 = vpop.f32.mrf.mxu0
    %v611 = vadd.f32 0.0, %v610
    %v612 = vpop.f32.mrf.mxu0
    %613 = vmatprep.mubr.f32.mxu0 0.0
    %614 = vmatmul.mubr.f32.gmra.mxu0 %v514
    %v615 = vpop.f32.mrf.mxu0
    %v616 = vadd.f32 0.0, %v615
    %v617 = vpop.f32.mrf.mxu0
    %618 = vmatprep.mubr.f32.mxu0 0.0
    %619 = vmatmul.mubr.f32.gmra.mxu0 %v517
    %v620 = vpop.f32.mrf.mxu0
    %v621 = vadd.f32 0.0, %v620
    %v622 = vpop.f32.mrf.mxu0
    %623 = vdwg.mxu0
    %v624 = vmul.f32 %v586, %v53
    %v625 = vmul.f32 %v591, %v54
    %v626 = vmul.f32 %v596, %v55
    %v627 = vmul.f32 %v601, %v56
    %v628 = vmul.f32 %v606, %v57
    %v629 = vmul.f32 %v611, %v58
    %v630 = vmul.f32 %v616, %v59
    %v631 = vmul.f32 %v621, %v60
    %v632 = vadd.f32 %v624, %v626
    %v633 = vadd.f32 %v625, %v627
    %v634 = vadd.f32 %v632, %v628
    %v635 = vadd.f32 %v633, %v629
    %v636 = vadd.f32 %v634, %v630
    %v637 = vadd.f32 %v635, %v631
    %642 = vrot.lane.b32.xlu0 %v42, 32
    %v643 = vpop.permute.xlu0 %642
    %644 = vrot.lane.b32.xlu0 %v43, 32
    %v645 = vpop.permute.xlu0 %644
    %646 = vrot.lane.b32.xlu0 %v44, 32
    %v647 = vpop.permute.xlu0 %646
    %648 = vrot.lane.b32.xlu0 %v45, 32
    %v649 = vpop.permute.xlu0 %648
    %655 = vrot.lane.b32.xlu0 %v145, 32
    %v656 = vpop.permute.xlu0 %655
    %v659 = vsel %vm81, %v636, 0
    %v662 = vsel %vm81, %v637, 0
    %664 = vmatprep.subr.mxu0 0.0
    %665 = vmatpush1.msra.mxu0 0.0
    %666 = vmatprep.subr.mxu0 0.0
    %667 = vmatpush1.msra.mxu0 0.0
    %668 = vmatprep.subr.mxu0 0.0
    %669 = vmatpush1.msra.mxu0 0.0
    %670 = vmatprep.subr.mxu0 0.0
    %671 = vmatpush1.msra.mxu0 0.0
    %672 = vmatprep.subr.mxu0 0.0
    %673 = vmatpush1.msra.mxu0 0.0
    %674 = vmatprep.subr.mxu0 0.0
    %675 = vmatpush1.msra.mxu0 0.0
    %676 = vmatprep.subr.mxu0 0.0
    %677 = vmatpush1.msra.mxu0 0.0
    %678 = vmatprep.subr.mxu0 0.0
    %679 = vmatpush1.msra.mxu0 0.0
    %680 = vmatprep.subr.mxu0 0.0
    %681 = vmatpush1.msra.mxu0 0.0
    %682 = vmatprep.subr.mxu0 0.0
    %683 = vmatpush1.msra.mxu0 0.0
    %684 = vmatprep.subr.mxu0 0.0
    %685 = vmatpush1.msra.mxu0 0.0
    %686 = vmatprep.subr.mxu0 0.0
    %687 = vmatpush1.msra.mxu0 0.0
    %688 = vmatprep.subr.mxu0 0.0
    %689 = vmatpush1.msra.mxu0 %v649
    %690 = vmatprep.subr.mxu0 0.0
    %691 = vmatpush1.msra.mxu0 %v647
    %692 = vmatprep.subr.mxu0 0.0
    %693 = vmatpush1.msra.mxu0 %v645
    %694 = vmatprep.subr.mxu0 0.0
    %695 = vmatpush1.msra.mxu0 %v643
    %696 = vmatprep.subr.mxu0 0.0
    %697 = vmatpush2.msra.mxu0 0.0
    %698 = vmatprep.subr.mxu0 0.0
    %699 = vmatpush2.msra.mxu0 0.0
    %700 = vmatprep.subr.mxu0 0.0
    %701 = vmatpush2.msra.mxu0 0.0
    %702 = vmatprep.subr.mxu0 0.0
    %703 = vmatpush2.msra.mxu0 0.0
    %704 = vmatprep.subr.mxu0 0.0
    %705 = vmatpush2.msra.mxu0 0.0
    %706 = vmatprep.subr.mxu0 0.0
    %707 = vmatpush2.msra.mxu0 0.0
    %708 = vmatprep.subr.mxu0 0.0
    %709 = vmatpush2.msra.mxu0 0.0
    %710 = vmatprep.subr.mxu0 0.0
    %711 = vmatpush2.msra.mxu0 0.0
    %712 = vmatprep.subr.mxu0 0.0
    %713 = vmatpush2.msra.mxu0 0.0
    %714 = vmatprep.subr.mxu0 0.0
    %715 = vmatpush2.msra.mxu0 0.0
    %716 = vmatprep.subr.mxu0 0.0
    %717 = vmatpush2.msra.mxu0 0.0
    %718 = vmatprep.subr.mxu0 0.0
    %719 = vmatpush2.msra.mxu0 0.0
    %720 = vmatprep.subr.mxu0 0.0
    %721 = vmatpush2.msra.mxu0 0.0
    %722 = vmatprep.subr.mxu0 0.0
    %723 = vmatpush2.msra.mxu0 0.0
    %724 = vmatprep.subr.mxu0 0.0
    %725 = vmatpush2.msra.mxu0 0.0
    %726 = vmatprep.subr.mxu0 0.0
    %727 = vmatpush2.msra.mxu0 0.0
    %728 = vmatprep.mubr.f32.mxu0 0.0
    %729 = vmatmul.mubr.f32.gmra.mxu0 %v659
    %v730 = vpop.f32.mrf.mxu0
    %v731 = vadd.f32 %v656, %v730
    %v732 = vpop.f32.mrf.mxu0
    %733 = vmatprep.mubr.f32.mxu0 0.0
    %734 = vmatmul.mubr.f32.gmra.mxu0 %v662
    %v735 = vpop.f32.mrf.mxu0
    %v736 = vadd.f32 %v656, %v735
    %v737 = vpop.f32.mrf.mxu0
    %738 = vdwg.mxu0
    %v739 = vadd.f32 %v40, %v731
    %v740 = vadd.f32 %v41, %v736
    %v741 = vsel %vm81, %v739, 0.0
    %742 = vadd.xlane.f32.xlu0 %v741
    %v743 = vpop.xlane.xlu0 %742
    %v744 = vsel %vm81, %v740, 0.0
    %745 = vadd.xlane.f32.xlu0 %v744
    %v746 = vpop.xlane.xlu0 %745
    %v747 = vmul.f32 %v743, %v88
    %v748 = vmul.f32 %v746, %v88
    %v749 = vsub.f32 %v739, %v747
    %v750 = vsub.f32 %v740, %v748
    %v751 = vmul.f32 %v749, %v749
    %v752 = vmul.f32 %v750, %v750
    %v753 = vsel %vm81, %v751, 0.0
    %754 = vadd.xlane.f32.xlu0 %v753
    %v755 = vpop.xlane.xlu0 %754
    %v756 = vsel %vm81, %v752, 0.0
    %757 = vadd.xlane.f32.xlu0 %v756
    %v758 = vpop.xlane.xlu0 %757
    %v759 = vmul.f32 %v755, %v101
    %v760 = vmul.f32 %v758, %v101
    %v761 = vrsqrt.pop %v759
    %v762 = vmul.f32 %v759, %v761
    %vm763 = vcmp.eq.f32.partialorder %v759, inf
    %v764 = vsel %vm763, %v759, %v762
    %vm765 = vcmp.eq.f32.partialorder %v759, 0.0
    %v766 = vand.u32 %v759, 2147483648
    %v767 = vsel %vm765, %v766, %v764
    %v768 = vrsqrt.pop %v760
    %v769 = vmul.f32 %v760, %v768
    %vm770 = vcmp.eq.f32.partialorder %v760, inf
    %v771 = vsel %vm770, %v760, %v769
    %vm772 = vcmp.eq.f32.partialorder %v760, 0.0
    %v773 = vand.u32 %v760, 2147483648
    %v774 = vsel %vm772, %v773, %v771
    %v775 = vadd.f32 %v767, 1e-06
    %v776 = vadd.f32 %v774, 1e-06
    %v777 = vrcp.pop %v775
    %v778 = vrcp.pop %v776
    %v779 = vmul.f32 %v775, %v777
    %v780 = vmul.f32 %v776, %v778
    %v781 = vsub.f32 2.0, %v779
    %v782 = vsub.f32 2.0, %v780
    %v783 = vmul.f32 %v777, %v781
    %v784 = vmul.f32 %v778, %v782
    %v785 = vmul.f32 %v749, %v783
    %v786 = vmul.f32 %v750, %v784
    %v787 = vlaneseq
    %v788 = vshrl.u32 %v787, 7
    %v789 = vsub.s32 0, %v788
    %v790 = vrot.slane %v51, %v789
    %v791 = vmul.f32 %v790, %v785
    %v792 = vmul.f32 %v790, %v786
    %v793 = vlaneseq
    %v794 = vshrl.u32 %v793, 7
    %v795 = vsub.s32 0, %v794
    %v796 = vrot.slane %v52, %v795
    %v797 = vadd.f32 %v791, %v796
    %v798 = vadd.f32 %v792, %v796
    %v799 = vlaneseq
    %v800 = vshrl.u32 %v799, 7
    %v801 = vsub.s32 0, %v800
    %v802 = vrot.slane %v47, %v801
    %v804 = vsel %vm81, %v797, 0
    %v807 = vsel %vm81, %v798, 0
    %809 = vmatprep.subr.mxu0 0.0
    %810 = vmatpush1.msra.mxu0 0.0
    %811 = vmatprep.subr.mxu0 0.0
    %812 = vmatpush1.msra.mxu0 0.0
    %813 = vmatprep.subr.mxu0 0.0
    %814 = vmatpush1.msra.mxu0 0.0
    %815 = vmatprep.subr.mxu0 0.0
    %816 = vmatpush1.msra.mxu0 0.0
    %817 = vmatprep.subr.mxu0 0.0
    %818 = vmatpush1.msra.mxu0 0.0
    %819 = vmatprep.subr.mxu0 0.0
    %820 = vmatpush1.msra.mxu0 0.0
    %821 = vmatprep.subr.mxu0 0.0
    %822 = vmatpush1.msra.mxu0 0.0
    %823 = vmatprep.subr.mxu0 0.0
    %824 = vmatpush1.msra.mxu0 0.0
    %825 = vmatprep.subr.mxu0 0.0
    %826 = vmatpush1.msra.mxu0 0.0
    %827 = vmatprep.subr.mxu0 0.0
    %828 = vmatpush1.msra.mxu0 0.0
    %829 = vmatprep.subr.mxu0 0.0
    %830 = vmatpush1.msra.mxu0 0.0
    %831 = vmatprep.subr.mxu0 0.0
    %832 = vmatpush1.msra.mxu0 0.0
    %833 = vmatprep.subr.mxu0 0.0
    %834 = vmatpush1.msra.mxu0 %v72
    %835 = vmatprep.subr.mxu0 0.0
    %836 = vmatpush1.msra.mxu0 %v71
    %837 = vmatprep.subr.mxu0 0.0
    %838 = vmatpush1.msra.mxu0 %v70
    %839 = vmatprep.subr.mxu0 0.0
    %840 = vmatpush1.msra.mxu0 %v69
    %841 = vmatprep.subr.mxu0 0.0
    %842 = vmatpush2.msra.mxu0 0.0
    %843 = vmatprep.subr.mxu0 0.0
    %844 = vmatpush2.msra.mxu0 0.0
    %845 = vmatprep.subr.mxu0 0.0
    %846 = vmatpush2.msra.mxu0 0.0
    %847 = vmatprep.subr.mxu0 0.0
    %848 = vmatpush2.msra.mxu0 0.0
    %849 = vmatprep.subr.mxu0 0.0
    %850 = vmatpush2.msra.mxu0 0.0
    %851 = vmatprep.subr.mxu0 0.0
    %852 = vmatpush2.msra.mxu0 0.0
    %853 = vmatprep.subr.mxu0 0.0
    %854 = vmatpush2.msra.mxu0 0.0
    %855 = vmatprep.subr.mxu0 0.0
    %856 = vmatpush2.msra.mxu0 0.0
    %857 = vmatprep.subr.mxu0 0.0
    %858 = vmatpush2.msra.mxu0 0.0
    %859 = vmatprep.subr.mxu0 0.0
    %860 = vmatpush2.msra.mxu0 0.0
    %861 = vmatprep.subr.mxu0 0.0
    %862 = vmatpush2.msra.mxu0 0.0
    %863 = vmatprep.subr.mxu0 0.0
    %864 = vmatpush2.msra.mxu0 0.0
    %865 = vmatprep.subr.mxu0 0.0
    %866 = vmatpush2.msra.mxu0 0.0
    %867 = vmatprep.subr.mxu0 0.0
    %868 = vmatpush2.msra.mxu0 0.0
    %869 = vmatprep.subr.mxu0 0.0
    %870 = vmatpush2.msra.mxu0 0.0
    %871 = vmatprep.subr.mxu0 0.0
    %872 = vmatpush2.msra.mxu0 0.0
    %873 = vmatprep.mubr.f32.mxu0 0.0
    %874 = vmatmul.mubr.f32.gmra.mxu0 %v804
    %v875 = vpop.f32.mrf.mxu0
    %v876 = vadd.f32 %v802, %v875
    %v877 = vpop.f32.mrf.mxu0
    %878 = vmatprep.mubr.f32.mxu0 0.0
    %879 = vmatmul.mubr.f32.gmra.mxu0 %v807
    %v880 = vpop.f32.mrf.mxu0
    %v881 = vadd.f32 %v802, %v880
    %v882 = vpop.f32.mrf.mxu0
    %883 = vdwg.mxu0
    %v884 = vmax.f32 %v876, 0.0
    %v885 = vmax.f32 %v881, 0.0
    %v886 = vlaneseq
    %v887 = vshrl.u32 %v886, 7
    %v888 = vsub.s32 0, %v887
    %v889 = vrot.slane %v48, %v888
    %vm890 = vcmask 523264
    %v892 = vsel %vm890, %v884, 0
    %v895 = vsel %vm890, %v885, 0
    %897 = vmatprep.subr.mxu0 0.0
    %898 = vmatpush1.msra.mxu0 0.0
    %899 = vmatprep.subr.mxu0 0.0
    %900 = vmatpush1.msra.mxu0 0.0
    %901 = vmatprep.subr.mxu0 0.0
    %902 = vmatpush1.msra.mxu0 0.0
    %903 = vmatprep.subr.mxu0 0.0
    %904 = vmatpush1.msra.mxu0 0.0
    %905 = vmatprep.subr.mxu0 0.0
    %906 = vmatpush1.msra.mxu0 0.0
    %907 = vmatprep.subr.mxu0 0.0
    %908 = vmatpush1.msra.mxu0 0.0
    %909 = vmatprep.subr.mxu0 0.0
    %910 = vmatpush1.msra.mxu0 0.0
    %911 = vmatprep.subr.mxu0 0.0
    %912 = vmatpush1.msra.mxu0 0.0
    %913 = vmatprep.subr.mxu0 0.0
    %914 = vmatpush1.msra.mxu0 %v80
    %915 = vmatprep.subr.mxu0 0.0
    %916 = vmatpush1.msra.mxu0 %v79
    %917 = vmatprep.subr.mxu0 0.0
    %918 = vmatpush1.msra.mxu0 %v78
    %919 = vmatprep.subr.mxu0 0.0
    %920 = vmatpush1.msra.mxu0 %v77
    %921 = vmatprep.subr.mxu0 0.0
    %922 = vmatpush1.msra.mxu0 %v76
    %923 = vmatprep.subr.mxu0 0.0
    %924 = vmatpush1.msra.mxu0 %v75
    %925 = vmatprep.subr.mxu0 0.0
    %926 = vmatpush1.msra.mxu0 %v74
    %927 = vmatprep.subr.mxu0 0.0
    %928 = vmatpush1.msra.mxu0 %v73
    %929 = vmatprep.subr.mxu0 0.0
    %930 = vmatpush2.msra.mxu0 0.0
    %931 = vmatprep.subr.mxu0 0.0
    %932 = vmatpush2.msra.mxu0 0.0
    %933 = vmatprep.subr.mxu0 0.0
    %934 = vmatpush2.msra.mxu0 0.0
    %935 = vmatprep.subr.mxu0 0.0
    %936 = vmatpush2.msra.mxu0 0.0
    %937 = vmatprep.subr.mxu0 0.0
    %938 = vmatpush2.msra.mxu0 0.0
    %939 = vmatprep.subr.mxu0 0.0
    %940 = vmatpush2.msra.mxu0 0.0
    %941 = vmatprep.subr.mxu0 0.0
    %942 = vmatpush2.msra.mxu0 0.0
    %943 = vmatprep.subr.mxu0 0.0
    %944 = vmatpush2.msra.mxu0 0.0
    %945 = vmatprep.subr.mxu0 0.0
    %946 = vmatpush2.msra.mxu0 0.0
    %947 = vmatprep.subr.mxu0 0.0
    %948 = vmatpush2.msra.mxu0 0.0
    %949 = vmatprep.subr.mxu0 0.0
    %950 = vmatpush2.msra.mxu0 0.0
    %951 = vmatprep.subr.mxu0 0.0
    %952 = vmatpush2.msra.mxu0 0.0
    %953 = vmatprep.subr.mxu0 0.0
    %954 = vmatpush2.msra.mxu0 0.0
    %955 = vmatprep.subr.mxu0 0.0
    %956 = vmatpush2.msra.mxu0 0.0
    %957 = vmatprep.subr.mxu0 0.0
    %958 = vmatpush2.msra.mxu0 0.0
    %959 = vmatprep.subr.mxu0 0.0
    %960 = vmatpush2.msra.mxu0 0.0
    %961 = vmatprep.mubr.f32.mxu0 0.0
    %962 = vmatmul.mubr.f32.gmra.mxu0 %v892
    %v963 = vpop.f32.mrf.mxu0
    %v964 = vadd.f32 %v889, %v963
    %v965 = vpop.f32.mrf.mxu0
    %966 = vmatprep.mubr.f32.mxu0 0.0
    %967 = vmatmul.mubr.f32.gmra.mxu0 %v895
    %v968 = vpop.f32.mrf.mxu0
    %v969 = vadd.f32 %v889, %v968
    %v970 = vpop.f32.mrf.mxu0
    %971 = vdwg.mxu0
    %v972 = vadd.f32 %v739, %v964
    %v973 = vadd.f32 %v740, %v969
    %974 = vst.msk [vmem:[#allocation7] sm:$0xff] %vm81, %v972
    %975 = vst.msk [vmem:[#allocation7 + $0x8] sm:$0xff] %vm81, %v973
    // Predicated region
    $region18: #{tpu_custom_call.1} parent=1 // pred_check
      _
    $region19: #{tpu_custom_call.1} parent=1 // pred_check_branch
      %977 = sbr.rel (0) target = $region21
    $region20: #{tpu_custom_call.1} parent=1 // pred_region
      %s979 = ssub.s32 256, 256
      %980 = vsyncadd [#allocation4], %s979
      %s981 = sshll.u32 [#allocation7], 4
      %s982 = int_to_ptr.vmem [resolvable:$true] %s981
      %987 = dma.vmem_to_hbm [thread:$0]  %s982, 256, %s2, [#allocation4], 128, 128, 8
    $region21: #{tpu_custom_call.1} parent=1 // pred_fallthru
      _
    // Predicated region
    $region22: #{tpu_custom_call.1} parent=1 // pred_check
      _
    $region23: #{tpu_custom_call.1} parent=1 // pred_check_branch
      %989 = sbr.rel (0) target = $region25
    $region24: #{tpu_custom_call.1} parent=1 // pred_region
      %990 = dma.done [#allocation4], 256
    $region25: #{tpu_custom_call.1} parent=1 // pred_fallthru
      _
    %991 = vsyncpa [#allocation3], 1
    %992 = vsyncpa [#allocation6], 1
    %993 = vsyncpa [#allocation4], 1

</llo_original>
